<compile_context>
chip_gen: v7x
topology: tpu7x:2x2x1
jax: 0.10.0
libtpu: 0.0.40
codegen_flags: <defaults>
</compile_context>

<pallas_src>
import functools
import itertools
from collections import defaultdict

import numpy as np
import jax
import jax.numpy as jnp
from jax.experimental import pallas as pl
from jax.experimental.pallas import tpu as pltpu

try:
    from scipy.optimize import linear_sum_assignment as _scipy_lsa
except Exception:  # pragma: no cover
    _scipy_lsa = None

VMEM = pltpu.MemorySpace.VMEM
SMEM = pltpu.MemorySpace.SMEM


def _round_up(n, m):
    return ((n + m - 1) // m) * m


# ---------------------------------------------------------------------------
# Kernel 1: matcher cost matrix for ALL layers at once.
#   rows = L*B*Q predictions (tiled over a "parallel" grid axis)
#   cols = Gpad ground-truth boxes (padded to a lane-dense multiple of 128)
# ---------------------------------------------------------------------------
def _matcher_cost_kernel(logits_ref, boxes_ref, onehot_t_ref, gtb_t_ref, cost_ref):
    x = logits_ref[...].astype(jnp.float32)                       # (TR, C)
    # Focal class cost directly from logits:
    #   -log(1-p) = softplus(x), -log(p) = softplus(-x); gamma==2 -> explicit squares.
    ax = jnp.abs(x)
    e = jnp.exp(-ax)
    sp = jnp.log(1.0 + e)
    sp_pos = jnp.maximum(x, 0.0) + sp                             # -log(1 - p)
    sp_neg = jnp.maximum(-x, 0.0) + sp                            # -log(p)
    inv = 1.0 / (1.0 + e)
    p = jnp.where(x >= 0.0, 1.0, e) * inv                         # sigmoid(x)
    q = jnp.where(x >= 0.0, e, 1.0) * inv                         # 1 - sigmoid(x)
    alpha = 0.25                                                  # HungarianMatcher constants
    neg = (1.0 - alpha) * (p * p) * sp_pos
    pos = alpha * (q * q) * sp_neg
    # Gather-by-class == matmul with the one-hot (C, Gpad) on the MXU.  bf16
    # operands are safe: the cost is only consumed by argmin matching.
    cost_class = jnp.dot((pos - neg).astype(jnp.bfloat16), onehot_t_ref[...],
                         preferred_element_type=jnp.float32)      # (TR, Gpad)

    b = boxes_ref[...].astype(jnp.float32)                        # (TR, 4) cxcywh
    g = gtb_t_ref[...].astype(jnp.float32)                        # (4, Gpad) cxcywh^T
    pcx, pcy, pw, ph = b[:, 0:1], b[:, 1:2], b[:, 2:3], b[:, 3:4]
    gcx, gcy, gw, gh = g[0:1, :], g[1:2, :], g[2:3, :], g[3:4, :]

    cost_boxes = (jnp.abs(pcx - gcx) + jnp.abs(pcy - gcy)
                  + jnp.abs(pw - gw) + jnp.abs(ph - gh))          # L1 cdist (TR, Gpad)

    px0, py0, px1, py1 = pcx - 0.5 * pw, pcy - 0.5 * ph, pcx + 0.5 * pw, pcy + 0.5 * ph
    gx0, gy0, gx1, gy1 = gcx - 0.5 * gw, gcy - 0.5 * gh, gcx + 0.5 * gw, gcy + 0.5 * gh
    area_p = (px1 - px0) * (py1 - py0)
    area_g = (gx1 - gx0) * (gy1 - gy0)
    iw = jnp.maximum(jnp.minimum(px1, gx1) - jnp.maximum(px0, gx0), 0.0)
    ih = jnp.maximum(jnp.minimum(py1, gy1) - jnp.maximum(py0, gy0), 0.0)
    inter = iw * ih
    union = area_p + area_g - inter
    iou = inter * pl.reciprocal(jnp.maximum(union, 1e-12), approx=True)
    ew = jnp.maximum(jnp.maximum(px1, gx1) - jnp.minimum(px0, gx0), 0.0)
    eh = jnp.maximum(jnp.maximum(py1, gy1) - jnp.minimum(py0, gy0), 0.0)
    enc = ew * eh
    giou = iou - (enc - union) * pl.reciprocal(jnp.maximum(enc, 1e-12), approx=True)

    # HungarianMatcher defaults: coef_bbox=5, coef_class=2, coef_giou=2
    cost_ref[...] = 5.0 * cost_boxes + 2.0 * cost_class + 2.0 * (-giou)


def matcher_cost(logits_flat, boxes_flat, onehot_t_bf16, gt_boxes_t, block_rows):
    Npad, C = logits_flat.shape
    Gpad = onehot_t_bf16.shape[1]
    return pl.pallas_call(
        _matcher_cost_kernel,
        out_shape=jax.ShapeDtypeStruct((Npad, Gpad), jnp.float32),
        grid=(Npad // block_rows,),
        in_specs=[pl.BlockSpec((block_rows, C), lambda i: (i, 0)),
                  pl.BlockSpec((block_rows, 4), lambda i: (i, 0)),
                  pl.BlockSpec((C, Gpad), lambda i: (0, 0)),
                  pl.BlockSpec((4, Gpad), lambda i: (0, 0))],
        out_specs=pl.BlockSpec((block_rows, Gpad), lambda i: (i, 0)),
        compiler_params=pltpu.CompilerParams(dimension_semantics=("parallel",)),
    )(logits_flat, boxes_flat, onehot_t_bf16, gt_boxes_t)


# ---------------------------------------------------------------------------
# Kernel 2: sigmoid focal loss, summed over ALL layers in one call.
# Inputs are lane-dense (rows, 128) slabs (flattened + padded with x=-40, t=0,
# which contributes exactly 0 in f32).  Output is a (1, 128) per-lane partial
# sum accumulated across the grid; the final lane reduce happens on the host.
# ---------------------------------------------------------------------------
@functools.lru_cache(maxsize=None)
def _make_focal_sum_kernel(alpha):
    def kernel(x_ref, t_ref, out_ref):
        @pl.when(pl.program_id(0) == 0)
        def _init():
            out_ref[...] = jnp.zeros_like(out_ref)
        x = x_ref[...].astype(jnp.float32)
        t = t_ref[...].astype(jnp.float32)
        prob = 1.0 / (1.0 + jnp.exp(-x))
        ce = jnp.maximum(x, 0.0) - x * t + jnp.log(1.0 + jnp.exp(-jnp.abs(x)))
        p_t = prob * t + (1.0 - prob) * (1.0 - t)
        om = 1.0 - p_t
        loss = ce * om * om                                   # gamma == 2 -> VPU squares
        alpha_t = alpha * t + (1.0 - alpha) * (1.0 - t)
        out_ref[...] += jnp.sum(alpha_t * loss, axis=0, keepdims=True)   # (1, 128)
    return kernel


def focal_sum(x2d, t2d, block_rows, alpha):
    R = x2d.shape[0]
    res = pl.pallas_call(
        _make_focal_sum_kernel(float(alpha)),
        out_shape=jax.ShapeDtypeStruct((1, 128), jnp.float32),
        grid=(R // block_rows,),
        in_specs=[pl.BlockSpec((block_rows, 128), lambda i: (i, 0)),
                  pl.BlockSpec((block_rows, 128), lambda i: (i, 0))],
        out_specs=pl.BlockSpec((1, 128), lambda i: (0, 0)),
        compiler_params=pltpu.CompilerParams(dimension_semantics=("arbitrary",)),
    )(x2d, t2d)
    return jnp.sum(res)


# ---------------------------------------------------------------------------
# Kernel 3: matched-pair losses for ALL layers: sum|src-gt|_1, sum(1-giou).
# Padded rows use identical boxes for src/gt -> contribute exactly 0.
# ---------------------------------------------------------------------------
def _pair_box_loss_kernel(s_ref, g_ref, out_ref):
    s = s_ref[...].astype(jnp.float32)                        # (M, 4)
    g = g_ref[...].astype(jnp.float32)                        # (M, 4)
    l1 = jnp.sum(jnp.abs(s - g))

    scx, scy, sw, sh = s[:, 0:1], s[:, 1:2], s[:, 2:3], s[:, 3:4]
    gcx, gcy, gw, gh = g[:, 0:1], g[:, 1:2], g[:, 2:3], g[:, 3:4]
    sx0, sy0, sx1, sy1 = scx - 0.5 * sw, scy - 0.5 * sh, scx + 0.5 * sw, scy + 0.5 * sh
    gx0, gy0, gx1, gy1 = gcx - 0.5 * gw, gcy - 0.5 * gh, gcx + 0.5 * gw, gcy + 0.5 * gh
    area_s = (sx1 - sx0) * (sy1 - sy0)
    area_g = (gx1 - gx0) * (gy1 - gy0)
    iw = jnp.maximum(jnp.minimum(sx1, gx1) - jnp.maximum(sx0, gx0), 0.0)
    ih = jnp.maximum(jnp.minimum(sy1, gy1) - jnp.maximum(sy0, gy0), 0.0)
    inter = iw * ih
    union = area_s + area_g - inter
    iou = inter / jnp.maximum(union, 1e-12)
    ew = jnp.maximum(jnp.maximum(sx1, gx1) - jnp.minimum(sx0, gx0), 0.0)
    eh = jnp.maximum(jnp.maximum(sy1, gy1) - jnp.minimum(sy0, gy0), 0.0)
    enc = ew * eh
    giou = iou - (enc - union) / jnp.maximum(enc, 1e-12)

    out_ref[0, 0] = l1
    out_ref[0, 1] = jnp.sum(1.0 - giou)


def pair_box_losses(src_boxes, gt_boxes):
    res = pl.pallas_call(
        _pair_box_loss_kernel,
        out_shape=jax.ShapeDtypeStruct((1, 2), jnp.float32),
        in_specs=[pl.BlockSpec(memory_space=VMEM)] * 2,
        out_specs=pl.BlockSpec(memory_space=SMEM),
    )(src_boxes, gt_boxes)
    return res[0, 0], res[0, 1]


# ---------------------------------------------------------------------------
# Kernel 4: fused layer-invariant losses — three domain cross-entropies (vs a
# constant label) plus per-layer MAE MSE — one pallas_call, (1, n) output.
# Domain inputs are (K, Mpad) with samples on lanes; padded columns have
# x[label]=0 and x[other]=-100 so they contribute exactly 0.
# MSE inputs are lane-dense (rows, 128) slabs zero-padded identically.
# ---------------------------------------------------------------------------
@functools.lru_cache(maxsize=None)
def _make_aux_kernel(n_ce, ce_label, ce_inv_counts, mse_inv_counts):
    n_mse = len(mse_inv_counts)

    def kernel(*refs):
        out_ref = refs[n_ce + 2 * n_mse]
        for j in range(n_ce):
            x = refs[j][...].astype(jnp.float32)              # (K, Mpad)
            m = jnp.max(x, axis=0, keepdims=True)
            lse = m + jnp.log(jnp.sum(jnp.exp(x - m), axis=0, keepdims=True))
            out_ref[0, j] = jnp.sum(lse - x[ce_label:ce_label + 1, :]) * ce_inv_counts[j]
        for j in range(n_mse):
            a = refs[n_ce + 2 * j][...].astype(jnp.float32)
            b = refs[n_ce + 2 * j + 1][...].astype(jnp.float32)
            d = a - b
            out_ref[0, n_ce + j] = jnp.sum(d * d) * mse_inv_counts[j]

    return kernel


def fused_aux_losses(domain_preds, domain_label, mae_pairs):
    inputs, ce_inv, mse_inv = [], [], []
    for pred in domain_preds:
        K = int(pred.shape[-1])
        M = int(np.prod(pred.shape[:-1]))
        Mpad = _round_up(max(M, 128), 128)
        x2 = jnp.transpose(pred.reshape(M, K))                # (K, M) — samples on lanes
        if Mpad > M:
            pad = jnp.full((K, Mpad - M), -100.0, jnp.float32)
            pad = pad.at[domain_label, :].set(0.0)            # padded cols contribute 0
            x2 = jnp.concatenate([x2, pad], axis=1)
        inputs.append(x2)
        ce_inv.append(1.0 / M)
    for a, b in mae_pairs:
        E = int(np.prod(a.shape))
        R = _round_up(-(-E // 128), 8)
        Epad = R * 128
        af = jnp.pad(a.reshape(-1), (0, Epad - E)).reshape(R, 128)
        bf = jnp.pad(b.reshape(-1), (0, Epad - E)).reshape(R, 128)
        inputs.extend([af, bf])
        mse_inv.append(1.0 / E)

    n_ce, n_mse = len(domain_preds), len(mae_pairs)
    res = pl.pallas_call(
        _make_aux_kernel(n_ce, int(domain_label), tuple(ce_inv), tuple(mse_inv)),
        out_shape=jax.ShapeDtypeStruct((1, n_ce + n_mse), jnp.float32),
        in_specs=[pl.BlockSpec(memory_space=VMEM)] * len(inputs),
        out_specs=pl.BlockSpec(memory_space=SMEM),
    )(*inputs)
    ce_vals = [res[0, j] for j in range(n_ce)]
    mse_vals = [res[0, n_ce + j] for j in range(n_mse)]
    return ce_vals, mse_vals


# ---------------------------------------------------------------------------
# Host-side Hungarian assignment.
# ---------------------------------------------------------------------------
def _linear_sum_assignment(cost):
    if _scipy_lsa is not None:
        rows, cols = _scipy_lsa(cost)
        return np.asarray(rows, np.int64), np.asarray(cols, np.int64)
    # Brute-force fallback for tiny problems only (scipy unavailable).
    nq, ng = cost.shape
    if ng == 0:
        return np.zeros((0,), np.int64), np.zeros((0,), np.int64)
    best_perm, best_cost = None, np.inf
    for perm in itertools.permutations(range(nq), ng):
        c = sum(cost[perm[j], j] for j in range(ng))
        if c < best_cost:
            best_cost, best_perm = c, perm
    pairs = sorted(zip(best_perm, range(ng)))
    rows = np.array([p[0] for p in pairs], dtype=np.int64)
    cols = np.array([p[1] for p in pairs], dtype=np.int64)
    return rows, cols


# ---------------------------------------------------------------------------
# Criterion
# ---------------------------------------------------------------------------
class SetCriterionPallas:
    def __init__(self, num_classes=9, coef_class=2, coef_boxes=5, coef_giou=2,
                 coef_domain=1.0, coef_domain_bac=0.3, coef_mae=1.0,
                 alpha_focal=0.25, alpha_dt=0.5, gamma_dt=0.9, max_dt=0.45):
        self.num_classes = num_classes
        self.coef_class = coef_class
        self.coef_boxes = coef_boxes
        self.coef_giou = coef_giou
        self.coef_domain = coef_domain
        self.coef_domain_bac = coef_domain_bac
        self.coef_mae = coef_mae
        self.alpha_focal = alpha_focal
        self.alpha_dt = alpha_dt
        self.gamma_dt = gamma_dt
        self.max_dt = max_dt
        self.logits_sum = [0.0 for _ in range(num_classes)]
        self.logits_count = [0 for _ in range(num_classes)]

    # ---- HungarianMatcher.forward, batched over all decoder layers ----
    def matcher_all(self, logits_all, boxes_all, annotations):
        L, B, Q, C = logits_all.shape
        gt_class = np.concatenate([np.asarray(a["labels"]) for a in annotations]).astype(np.int32)
        gt_boxes = np.concatenate([np.asarray(a["boxes"]) for a in annotations], 0).astype(np.float32)
        G = int(gt_class.shape[0])
        Gpad = max(128, _round_up(G, 128))                    # lane-dense cost columns
        onehot_t = np.zeros((C, Gpad), np.float32)
        onehot_t[gt_class, np.arange(G)] = 1.0
        gtb_t = np.tile(np.array([[0.5], [0.5], [1.0], [1.0]], np.float32), (1, Gpad))
        gtb_t[:, :G] = gt_boxes.T

        N = L * B * Q
        TR = 512 if N >= 512 else _round_up(N, 8)
        Npad = _round_up(N, TR)
        logits_flat = logits_all.reshape(N, C)
        boxes_flat = boxes_all.reshape(N, 4)
        if Npad > N:
            logits_flat = jnp.pad(logits_flat, ((0, Npad - N), (0, 0)))
            boxes_flat = jnp.pad(boxes_flat, ((0, Npad - N), (0, 0)), constant_values=0.25)

        cost = matcher_cost(logits_flat, boxes_flat,
                            jnp.asarray(onehot_t, dtype=jnp.bfloat16),
                            jnp.asarray(gtb_t), TR)
        cost_np = np.asarray(cost)[:N, :G].reshape(L, B, Q, G)   # single device->host sync

        sizes = [len(a["boxes"]) for a in annotations]
        indices_all = []
        for i in range(L):
            indices, off = [], 0
            for b, s in enumerate(sizes):
                rows, cols = _linear_sum_assignment(cost_np[i, b, :, off:off + s])
                indices.append((rows, cols))
                off += s
            indices_all.append(indices)
        return indices_all

    # ---- sum over layers of loss_class_i (== total focal sum / num_boxes) ----
    def loss_class_all(self, logits_all, annotations, indices_all, num_boxes):
        L, B, Q, C = logits_all.shape
        gt_classes = np.full((L, B, Q), C, dtype=np.int64)
        for i in range(L):
            for b, (src, col) in enumerate(indices_all[i]):
                if len(src):
                    gt_classes[i, b, np.asarray(src)] = np.asarray(annotations[b]["labels"])[np.asarray(col)]
        onehot = np.eye(C + 1, dtype=np.float32)[gt_classes][..., :C]   # (L,B,Q,C)

        E = L * B * Q * C
        R0 = -(-E // 128)
        TB = 256 if R0 >= 256 else _round_up(R0, 8)
        Rpad = _round_up(R0, TB)
        Epad = Rpad * 128
        x = jnp.pad(logits_all.reshape(-1), (0, Epad - E),
                    constant_values=-40.0).reshape(Rpad, 128)           # pad -> exact 0 loss
        t_flat = np.zeros(Epad, np.float32)
        t_flat[:E] = onehot.reshape(-1)
        t = jnp.asarray(t_flat).reshape(Rpad, 128)
        total = focal_sum(x, t, TB, self.alpha_focal)
        return total / num_boxes

    # ---- sum over layers of (L1, 1-GIoU) losses of matched pairs ----
    def loss_boxes_giou_all(self, boxes_all, annotations, indices_all, num_boxes):
        L, B, Q, _ = boxes_all.shape
        flat_idx, gt_list = [], []
        for i in range(L):
            for b, (src, col) in enumerate(indices_all[i]):
                if len(src):
                    flat_idx.append(i * B * Q + b * Q + np.asarray(src, np.int64))
                    gt_list.append(np.asarray(annotations[b]["boxes"], np.float32)[np.asarray(col, np.int64)])
        flat_idx = np.concatenate(flat_idx)
        gt = np.concatenate(gt_list, axis=0).astype(np.float32)
        M = int(flat_idx.shape[0])
        Mpad = _round_up(max(M, 8), 8)
        pad_box = np.array([0.5, 0.5, 1.0, 1.0], np.float32)

        # Gather predicted boxes on device (no boxes_all round-trip).
        src = jnp.take(boxes_all.reshape(L * B * Q, 4),
                       jnp.asarray(flat_idx, jnp.int32), axis=0)
        if Mpad > M:
            src = jnp.concatenate(
                [src, jnp.broadcast_to(jnp.asarray(pad_box), (Mpad - M, 4))], axis=0)
            gt = np.concatenate([gt, np.tile(pad_box, (Mpad - M, 1))], axis=0)

        l1_sum, giou_sum = pair_box_losses(src, jnp.asarray(gt))
        return l1_sum / num_boxes, giou_sum / num_boxes

    def record_positive_logits(self, probs, indices):
        probs = np.asarray(probs)
        for b, (src, _) in enumerate(indices):
            if len(src) == 0:
                continue
            sel = probs[b, np.asarray(src)]
            labels = sel.argmax(axis=1)
            pos = sel.max(axis=1)
            for lab, logit in zip(labels, pos):
                self.logits_sum[int(lab)] += float(logit)
                self.logits_count[int(lab)] += 1

    def forward(self, out, annotations=None, domain_label=None, enable_mae=False):
        logits_all = out["logits_all"]
        boxes_all = out["boxes_all"]
        L = logits_all.shape[0]
        loss = jnp.zeros((1,), jnp.float32)
        loss_dict = defaultdict(float)

        # ---- matching losses (batched over all L layers, one matcher cost call) ----
        if annotations is not None:
            num_boxes = max(float(sum(len(a["labels"]) for a in annotations)), 1.0)  # world size == 1
            indices_all = self.matcher_all(logits_all, boxes_all, annotations)
            sum_lc = self.loss_class_all(logits_all, annotations, indices_all, num_boxes)
            sum_lb, sum_lg = self.loss_boxes_giou_all(boxes_all, annotations, indices_all, num_boxes)
            # reference accumulates per layer then divides by L
            loss_dict["loss_class"] = sum_lc / L
            loss_dict["loss_boxes"] = sum_lb / L
            loss_dict["loss_giou"] = sum_lg / L
            loss = loss + (self.coef_class * sum_lc + self.coef_boxes * sum_lb
                           + self.coef_giou * sum_lg) / L
            if domain_label == 0:
                self.record_positive_logits(jax.nn.sigmoid(logits_all[L - 1]), indices_all[L - 1])

        # ---- layer-invariant losses, hoisted out of the per-layer loop.
        #      (reference adds them L times then divides by L == adding once) ----
        domain_preds, mae_pairs, n_mae_layers = [], [], 0
        if domain_label is not None:
            domain_preds = [out["domain_bac_all"], out["domain_enc_all"], out["domain_dec_all"]]
        if enable_mae:
            n_mae_layers = len(out["mae_output"])
            mae_pairs = [(out["mae_output"][k], out["features"][k])
                         for k in range(n_mae_layers) if out["mae_output"][k].shape[1] > 0]
        ce_vals, mse_vals = [], []
        if domain_preds or mae_pairs:
            ce_vals, mse_vals = fused_aux_losses(
                domain_preds, int(domain_label) if domain_label is not None else 0, mae_pairs)

        if domain_label is not None:
            l_bac, l_enc, l_dec = ce_vals
            loss_domain = l_enc + l_dec + self.coef_domain_bac * l_bac
            loss_dict["loss_domain_bac"] = l_bac
            loss_dict["loss_domain_enc"] = l_enc
            loss_dict["loss_domain_dec"] = l_dec
            loss_dict["loss_domain"] = loss_domain
            loss = loss + self.coef_domain * loss_domain

        if enable_mae:
            lm = sum(mse_vals) / max(n_mae_layers, 1)
            loss_dict["loss_mae"] = lm
            loss = loss + self.coef_mae * lm

        return loss, dict(loss_dict)


# ---------------------------------------------------------------------------
if __name__ == "__main__":
    key = jax.random.PRNGKey(0)
    ks = jax.random.split(key, 16)

    L, B, Q, C = 2, 2, 8, 9                 # decoder layers, batch, queries, classes
    logits_all = jax.random.normal(ks[0], (L, B, Q, C), jnp.float32)
    boxes_cxcy = jax.random.uniform(ks[1], (L, B, Q, 2), minval=0.2, maxval=0.8)
    boxes_wh = jax.random.uniform(ks[2], (L, B, Q, 2), minval=0.05, maxval=0.3)
    boxes_all = jnp.concatenate([boxes_cxcy, boxes_wh], axis=-1).astype(jnp.float32)

    def make_anno(kl, kb1, kb2, n):
        labels = np.asarray(jax.random.randint(kl, (n,), 0, C), dtype=np.int64)
        bxy = jax.random.uniform(kb1, (n, 2), minval=0.2, maxval=0.8)
        bwh = jax.random.uniform(kb2, (n, 2), minval=0.05, maxval=0.3)
        return {"labels": labels, "boxes": np.asarray(jnp.concatenate([bxy, bwh], -1), np.float32)}

    annotations = [make_anno(ks[3], ks[4], ks[5], 3),
                   make_anno(ks[6], ks[7], ks[8], 2)]

    out = {
        "logits_all": logits_all,
        "boxes_all": boxes_all,
        "domain_bac_all": jax.random.normal(ks[9], (B, 4, 8, 2), jnp.float32),
        "domain_enc_all": jax.random.normal(ks[10], (B, 3, 16, 2), jnp.float32),
        "domain_dec_all": jax.random.normal(ks[11], (B, 3, Q, 2), jnp.float32),
        "features": [jax.random.normal(ks[12], (B, 16, 32), jnp.float32),
                     jax.random.normal(ks[13], (B, 16, 32), jnp.float32)],
        "mae_output": [jax.random.normal(ks[14], (B, 16, 32), jnp.float32),
                       jax.random.normal(ks[15], (B, 16, 32), jnp.float32)],
    }

    criterion = SetCriterionPallas(num_classes=C)
    loss, loss_dict = criterion.forward(out, annotations=annotations,
                                        domain_label=0, enable_mae=True)
    jax.block_until_ready(loss)
    for v in loss_dict.values():
        if hasattr(v, "block_until_ready"):
            v.block_until_ready()
    print("KERNEL_OK")
</pallas_src>

<mosaic_0001>
module attributes {stable_mosaic.version = 11 : i64} {
  func.func @_matcher_cost_kernel(%arg0: i32, %arg1: memref<32x9xf32, #tpu.memory_space<vmem>>, %arg2: memref<32x4xf32, #tpu.memory_space<vmem>>, %arg3: memref<9x128xbf16, #tpu.memory_space<vmem>>, %arg4: memref<4x128xf32, #tpu.memory_space<vmem>>, %arg5: memref<32x128xf32, #tpu.memory_space<vmem>>) attributes {dimension_semantics = [#tpu.dimension_semantics<parallel>], iteration_bounds = array<i64: 1>, scalar_prefetch = 0 : i64, scratch_operands = 0 : i64, tpu.core_type = #tpu.core_type<tc>, window_params = [{transform_indices = @transform_0, window_bounds = array<i64: 32, 9>}, {transform_indices = @transform_1, window_bounds = array<i64: 32, 4>}, {pipeline_mode = #tpu.pipeline_mode<synchronous>, transform_indices = @transform_2, window_bounds = array<i64: 9, 128>}, {pipeline_mode = #tpu.pipeline_mode<synchronous>, transform_indices = @transform_3, window_bounds = array<i64: 4, 128>}, {transform_indices = @transform_4, window_bounds = array<i64: 32, 128>}]} {
    %c0 = arith.constant 0 : index
    %c0_0 = arith.constant 0 : index
    %0 = vector.load %arg1[%c0, %c0_0] : memref<32x9xf32, #tpu.memory_space<vmem>>, vector<32x9xf32>
    %1 = math.absf %0 : vector<32x9xf32>
    %cst = arith.constant 0.000000e+00 : f32
    %2 = vector.broadcast %cst : f32 to vector<32x9xf32>
    %3 = arith.subf %2, %1 : vector<32x9xf32>
    %4 = math.exp %3 : vector<32x9xf32>
    %cst_1 = arith.constant 1.000000e+00 : f32
    %5 = vector.broadcast %cst_1 : f32 to vector<32x9xf32>
    %6 = arith.addf %5, %4 : vector<32x9xf32>
    %7 = math.log %6 : vector<32x9xf32>
    %cst_2 = arith.constant 0.000000e+00 : f32
    %8 = vector.broadcast %cst_2 : f32 to vector<32x9xf32>
    %9 = arith.maximumf %0, %8 : vector<32x9xf32>
    %10 = arith.addf %9, %7 : vector<32x9xf32>
    %cst_3 = arith.constant 0.000000e+00 : f32
    %11 = vector.broadcast %cst_3 : f32 to vector<32x9xf32>
    %12 = arith.subf %11, %0 : vector<32x9xf32>
    %cst_4 = arith.constant 0.000000e+00 : f32
    %13 = vector.broadcast %cst_4 : f32 to vector<32x9xf32>
    %14 = arith.maximumf %12, %13 : vector<32x9xf32>
    %15 = arith.addf %14, %7 : vector<32x9xf32>
    %cst_5 = arith.constant 1.000000e+00 : f32
    %16 = vector.broadcast %cst_5 : f32 to vector<32x9xf32>
    %17 = arith.addf %16, %4 : vector<32x9xf32>
    %cst_6 = arith.constant 1.000000e+00 : f32
    %18 = vector.broadcast %cst_6 : f32 to vector<32x9xf32>
    %19 = arith.divf %18, %17 : vector<32x9xf32>
    %cst_7 = arith.constant 0.000000e+00 : f32
    %20 = vector.broadcast %cst_7 : f32 to vector<32x9xf32>
    %21 = arith.cmpf oge, %0, %20 : vector<32x9xf32>
    %cst_8 = arith.constant 1.000000e+00 : f32
    %22 = vector.broadcast %cst_8 : f32 to vector<32x9xf32>
    %23 = arith.select %21, %22, %4 : vector<32x9xi1>, vector<32x9xf32>
    %24 = arith.mulf %23, %19 : vector<32x9xf32>
    %cst_9 = arith.constant 0.000000e+00 : f32
    %25 = vector.broadcast %cst_9 : f32 to vector<32x9xf32>
    %26 = arith.cmpf oge, %0, %25 : vector<32x9xf32>
    %cst_10 = arith.constant 1.000000e+00 : f32
    %27 = vector.broadcast %cst_10 : f32 to vector<32x9xf32>
    %28 = arith.select %26, %4, %27 : vector<32x9xi1>, vector<32x9xf32>
    %29 = arith.mulf %28, %19 : vector<32x9xf32>
    %30 = arith.mulf %24, %24 : vector<32x9xf32>
    %cst_11 = arith.constant 7.500000e-01 : f32
    %31 = vector.broadcast %cst_11 : f32 to vector<32x9xf32>
    %32 = arith.mulf %31, %30 : vector<32x9xf32>
    %33 = arith.mulf %32, %10 : vector<32x9xf32>
    %34 = arith.mulf %29, %29 : vector<32x9xf32>
    %cst_12 = arith.constant 2.500000e-01 : f32
    %35 = vector.broadcast %cst_12 : f32 to vector<32x9xf32>
    %36 = arith.mulf %35, %34 : vector<32x9xf32>
    %37 = arith.mulf %36, %15 : vector<32x9xf32>
    %38 = arith.subf %37, %33 : vector<32x9xf32>
    %39 = arith.truncf %38 : vector<32x9xf32> to vector<32x9xbf16>
    %c0_13 = arith.constant 0 : index
    %c0_14 = arith.constant 0 : index
    %40 = vector.load %arg3[%c0_13, %c0_14] : memref<9x128xbf16, #tpu.memory_space<vmem>>, vector<9x128xbf16>
    %cst_15 = arith.constant dense<0.000000e+00> : vector<32x128xf32>
    %41 = tpu.matmul %39, %40, %cst_15 {dimension_numbers = #tpu.dot_dimension_numbers<[1], [0], [0], [1], [0, 0, 1, 1], [], []>} : vector<32x9xbf16>, vector<9x128xbf16>, vector<32x128xf32> -> vector<32x128xf32>
    %c0_16 = arith.constant 0 : index
    %c0_17 = arith.constant 0 : index
    %42 = vector.load %arg2[%c0_16, %c0_17] : memref<32x4xf32, #tpu.memory_space<vmem>>, vector<32x4xf32>
    %c0_18 = arith.constant 0 : index
    %c0_19 = arith.constant 0 : index
    %43 = vector.load %arg4[%c0_18, %c0_19] : memref<4x128xf32, #tpu.memory_space<vmem>>, vector<4x128xf32>
    %44 = vector.extract_strided_slice %42 {offsets = [0, 0], sizes = [32, 1], strides = [1, 1]} : vector<32x4xf32> to vector<32x1xf32>
    %45 = vector.extract_strided_slice %42 {offsets = [0, 1], sizes = [32, 1], strides = [1, 1]} : vector<32x4xf32> to vector<32x1xf32>
    %46 = vector.extract_strided_slice %42 {offsets = [0, 2], sizes = [32, 1], strides = [1, 1]} : vector<32x4xf32> to vector<32x1xf32>
    %47 = vector.extract_strided_slice %42 {offsets = [0, 3], sizes = [32, 1], strides = [1, 1]} : vector<32x4xf32> to vector<32x1xf32>
    %48 = vector.extract_strided_slice %43 {offsets = [0, 0], sizes = [1, 128], strides = [1, 1]} : vector<4x128xf32> to vector<1x128xf32>
    %49 = vector.extract_strided_slice %43 {offsets = [1, 0], sizes = [1, 128], strides = [1, 1]} : vector<4x128xf32> to vector<1x128xf32>
    %50 = vector.extract_strided_slice %43 {offsets = [2, 0], sizes = [1, 128], strides = [1, 1]} : vector<4x128xf32> to vector<1x128xf32>
    %51 = vector.extract_strided_slice %43 {offsets = [3, 0], sizes = [1, 128], strides = [1, 1]} : vector<4x128xf32> to vector<1x128xf32>
    %52 = vector.broadcast %44 : vector<32x1xf32> to vector<32x128xf32>
    %53 = vector.broadcast %48 : vector<1x128xf32> to vector<32x128xf32>
    %54 = arith.subf %52, %53 : vector<32x128xf32>
    %55 = math.absf %54 : vector<32x128xf32>
    %56 = vector.broadcast %45 : vector<32x1xf32> to vector<32x128xf32>
    %57 = vector.broadcast %49 : vector<1x128xf32> to vector<32x128xf32>
    %58 = arith.subf %56, %57 : vector<32x128xf32>
    %59 = math.absf %58 : vector<32x128xf32>
    %60 = arith.addf %55, %59 : vector<32x128xf32>
    %61 = vector.broadcast %46 : vector<32x1xf32> to vector<32x128xf32>
    %62 = vector.broadcast %50 : vector<1x128xf32> to vector<32x128xf32>
    %63 = arith.subf %61, %62 : vector<32x128xf32>
    %64 = math.absf %63 : vector<32x128xf32>
    %65 = arith.addf %60, %64 : vector<32x128xf32>
    %66 = vector.broadcast %47 : vector<32x1xf32> to vector<32x128xf32>
    %67 = vector.broadcast %51 : vector<1x128xf32> to vector<32x128xf32>
    %68 = arith.subf %66, %67 : vector<32x128xf32>
    %69 = math.absf %68 : vector<32x128xf32>
    %70 = arith.addf %65, %69 : vector<32x128xf32>
    %cst_20 = arith.constant 5.000000e-01 : f32
    %71 = vector.broadcast %cst_20 : f32 to vector<32x1xf32>
    %72 = arith.mulf %71, %46 : vector<32x1xf32>
    %73 = arith.subf %44, %72 : vector<32x1xf32>
    %cst_21 = arith.constant 5.000000e-01 : f32
    %74 = vector.broadcast %cst_21 : f32 to vector<32x1xf32>
    %75 = arith.mulf %74, %47 : vector<32x1xf32>
    %76 = arith.subf %45, %75 : vector<32x1xf32>
    %cst_22 = arith.constant 5.000000e-01 : f32
    %77 = vector.broadcast %cst_22 : f32 to vector<32x1xf32>
    %78 = arith.mulf %77, %46 : vector<32x1xf32>
    %79 = arith.addf %44, %78 : vector<32x1xf32>
    %cst_23 = arith.constant 5.000000e-01 : f32
    %80 = vector.broadcast %cst_23 : f32 to vector<32x1xf32>
    %81 = arith.mulf %80, %47 : vector<32x1xf32>
    %82 = arith.addf %45, %81 : vector<32x1xf32>
    %cst_24 = arith.constant 5.000000e-01 : f32
    %83 = vector.broadcast %cst_24 : f32 to vector<1x128xf32>
    %84 = arith.mulf %83, %50 : vector<1x128xf32>
    %85 = arith.subf %48, %84 : vector<1x128xf32>
    %cst_25 = arith.constant 5.000000e-01 : f32
    %86 = vector.broadcast %cst_25 : f32 to vector<1x128xf32>
    %87 = arith.mulf %86, %51 : vector<1x128xf32>
    %88 = arith.subf %49, %87 : vector<1x128xf32>
    %cst_26 = arith.constant 5.000000e-01 : f32
    %89 = vector.broadcast %cst_26 : f32 to vector<1x128xf32>
    %90 = arith.mulf %89, %50 : vector<1x128xf32>
    %91 = arith.addf %48, %90 : vector<1x128xf32>
    %cst_27 = arith.constant 5.000000e-01 : f32
    %92 = vector.broadcast %cst_27 : f32 to vector<1x128xf32>
    %93 = arith.mulf %92, %51 : vector<1x128xf32>
    %94 = arith.addf %49, %93 : vector<1x128xf32>
    %95 = arith.subf %79, %73 : vector<32x1xf32>
    %96 = arith.subf %82, %76 : vector<32x1xf32>
    %97 = arith.mulf %95, %96 : vector<32x1xf32>
    %98 = arith.subf %91, %85 : vector<1x128xf32>
    %99 = arith.subf %94, %88 : vector<1x128xf32>
    %100 = arith.mulf %98, %99 : vector<1x128xf32>
    %101 = vector.broadcast %79 : vector<32x1xf32> to vector<32x128xf32>
    %102 = vector.broadcast %91 : vector<1x128xf32> to vector<32x128xf32>
    %103 = arith.minimumf %101, %102 : vector<32x128xf32>
    %104 = vector.broadcast %73 : vector<32x1xf32> to vector<32x128xf32>
    %105 = vector.broadcast %85 : vector<1x128xf32> to vector<32x128xf32>
    %106 = arith.maximumf %104, %105 : vector<32x128xf32>
    %107 = arith.subf %103, %106 : vector<32x128xf32>
    %cst_28 = arith.constant 0.000000e+00 : f32
    %108 = vector.broadcast %cst_28 : f32 to vector<32x128xf32>
    %109 = arith.maximumf %107, %108 : vector<32x128xf32>
    %110 = vector.broadcast %82 : vector<32x1xf32> to vector<32x128xf32>
    %111 = vector.broadcast %94 : vector<1x128xf32> to vector<32x128xf32>
    %112 = arith.minimumf %110, %111 : vector<32x128xf32>
    %113 = vector.broadcast %76 : vector<32x1xf32> to vector<32x128xf32>
    %114 = vector.broadcast %88 : vector<1x128xf32> to vector<32x128xf32>
    %115 = arith.maximumf %113, %114 : vector<32x128xf32>
    %116 = arith.subf %112, %115 : vector<32x128xf32>
    %cst_29 = arith.constant 0.000000e+00 : f32
    %117 = vector.broadcast %cst_29 : f32 to vector<32x128xf32>
    %118 = arith.maximumf %116, %117 : vector<32x128xf32>
    %119 = arith.mulf %109, %118 : vector<32x128xf32>
    %120 = vector.broadcast %97 : vector<32x1xf32> to vector<32x128xf32>
    %121 = vector.broadcast %100 : vector<1x128xf32> to vector<32x128xf32>
    %122 = arith.addf %120, %121 : vector<32x128xf32>
    %123 = arith.subf %122, %119 : vector<32x128xf32>
    %cst_30 = arith.constant 9.99999996E-13 : f32
    %124 = vector.broadcast %cst_30 : f32 to vector<32x128xf32>
    %125 = arith.maximumf %123, %124 : vector<32x128xf32>
    %126 = tpu.reciprocal %125 {approx = true} : vector<32x128xf32> -> vector<32x128xf32>
    %127 = arith.mulf %119, %126 : vector<32x128xf32>
    %128 = vector.broadcast %79 : vector<32x1xf32> to vector<32x128xf32>
    %129 = vector.broadcast %91 : vector<1x128xf32> to vector<32x128xf32>
    %130 = arith.maximumf %128, %129 : vector<32x128xf32>
    %131 = vector.broadcast %73 : vector<32x1xf32> to vector<32x128xf32>
    %132 = vector.broadcast %85 : vector<1x128xf32> to vector<32x128xf32>
    %133 = arith.minimumf %131, %132 : vector<32x128xf32>
    %134 = arith.subf %130, %133 : vector<32x128xf32>
    %cst_31 = arith.constant 0.000000e+00 : f32
    %135 = vector.broadcast %cst_31 : f32 to vector<32x128xf32>
    %136 = arith.maximumf %134, %135 : vector<32x128xf32>
    %137 = vector.broadcast %82 : vector<32x1xf32> to vector<32x128xf32>
    %138 = vector.broadcast %94 : vector<1x128xf32> to vector<32x128xf32>
    %139 = arith.maximumf %137, %138 : vector<32x128xf32>
    %140 = vector.broadcast %76 : vector<32x1xf32> to vector<32x128xf32>
    %141 = vector.broadcast %88 : vector<1x128xf32> to vector<32x128xf32>
    %142 = arith.minimumf %140, %141 : vector<32x128xf32>
    %143 = arith.subf %139, %142 : vector<32x128xf32>
    %cst_32 = arith.constant 0.000000e+00 : f32
    %144 = vector.broadcast %cst_32 : f32 to vector<32x128xf32>
    %145 = arith.maximumf %143, %144 : vector<32x128xf32>
    %146 = arith.mulf %136, %145 : vector<32x128xf32>
    %147 = arith.subf %146, %123 : vector<32x128xf32>
    %cst_33 = arith.constant 9.99999996E-13 : f32
    %148 = vector.broadcast %cst_33 : f32 to vector<32x128xf32>
    %149 = arith.maximumf %146, %148 : vector<32x128xf32>
    %150 = tpu.reciprocal %149 {approx = true} : vector<32x128xf32> -> vector<32x128xf32>
    %151 = arith.mulf %147, %150 : vector<32x128xf32>
    %152 = arith.subf %127, %151 : vector<32x128xf32>
    %cst_34 = arith.constant 5.000000e+00 : f32
    %153 = vector.broadcast %cst_34 : f32 to vector<32x128xf32>
    %154 = arith.mulf %153, %70 : vector<32x128xf32>
    %cst_35 = arith.constant 2.000000e+00 : f32
    %155 = vector.broadcast %cst_35 : f32 to vector<32x128xf32>
    %156 = arith.mulf %155, %41 : vector<32x128xf32>
    %157 = arith.addf %154, %156 : vector<32x128xf32>
    %cst_36 = arith.constant 0.000000e+00 : f32
    %158 = vector.broadcast %cst_36 : f32 to vector<32x128xf32>
    %159 = arith.subf %158, %152 : vector<32x128xf32>
    %cst_37 = arith.constant 2.000000e+00 : f32
    %160 = vector.broadcast %cst_37 : f32 to vector<32x128xf32>
    %161 = arith.mulf %160, %159 : vector<32x128xf32>
    %162 = arith.addf %157, %161 : vector<32x128xf32>
    %c0_38 = arith.constant 0 : index
    %c0_39 = arith.constant 0 : index
    %163 = vector.load %arg5[%c0_38, %c0_39] : memref<32x128xf32, #tpu.memory_space<vmem>>, vector<32x128xf32>
    tpu.vector_store %arg5[%c0_38, %c0_39], %162 {strides = array<i32>} : memref<32x128xf32, #tpu.memory_space<vmem>>, vector<32x128xf32>,
    return
  }
  func.func @transform_0(%arg0: i32) -> (i32, i32) {
    %c0_i32 = arith.constant 0 : i32
    %c0_i32_0 = arith.constant 0 : i32
    return %arg0, %c0_i32 : i32, i32
  }
  func.func @transform_1(%arg0: i32) -> (i32, i32) {
    %c0_i32 = arith.constant 0 : i32
    %c0_i32_0 = arith.constant 0 : i32
    return %arg0, %c0_i32 : i32, i32
  }
  func.func @transform_2(%arg0: i32) -> (i32, i32) {
    %c0_i32 = arith.constant 0 : i32
    %c0_i32_0 = arith.constant 0 : i32
    %c0_i32_1 = arith.constant 0 : i32
    return %c0_i32, %c0_i32_0 : i32, i32
  }
  func.func @transform_3(%arg0: i32) -> (i32, i32) {
    %c0_i32 = arith.constant 0 : i32
    %c0_i32_0 = arith.constant 0 : i32
    %c0_i32_1 = arith.constant 0 : i32
    return %c0_i32, %c0_i32_0 : i32, i32
  }
  func.func @transform_4(%arg0: i32) -> (i32, i32) {
    %c0_i32 = arith.constant 0 : i32
    %c0_i32_0 = arith.constant 0 : i32
    return %arg0, %c0_i32 : i32, i32
  }
}

</mosaic_0001>

<llo_original>
// kernel: tpu_custom_call.1
$region0: #{tpu_custom_call.1}
  #allocation0 [shape = 'u32[]', space=smem, size = 0x4, offset = 0x4, fixed_abs, tag = 'smem constant byte address 0x4 - core index']
  #allocation1 [shape = 'u32[144,128]{1,0:T(1,128)}', space=vmem, size = 0x12000, scoped, tag = 'internal scratch']
  %s0 = inlined_call_operand.vmem [shape: f32[32,9], index: 0, kind: input, shape index: {}]
  %s1 = inlined_call_operand.vmem [shape: f32[32,4], index: 1, kind: input, shape index: {}]
  %s2 = inlined_call_operand.vmem [shape: bf16[9,128], index: 2, kind: input, shape index: {}]
  %s3 = inlined_call_operand.vmem [shape: f32[4,128], index: 3, kind: input, shape index: {}]
  %s4 = inlined_call_operand.hbm [shape: f32[32,128], index: 4, kind: output, shape index: {}]
  %s5 = sld [smem:[#allocation0]]
  $region26: #{tpu_custom_call.1} parent=0
    _
  %s7 = ssub.s32 1, %s5
  %s8 = scalar_select 0, %s7, %s5
  $region1: #{tpu_custom_call.1} parent=0
    #allocation2 [shape = 'u8[16384]{0}', space=vmem, size = 0x4000, scoped, tag = 'output window, operand 0, single buffered']
    #allocation3 [shape = 's32[1]{0}', space=sflag, size = 0x4, scoped, tag = 'scoped memory for tpu_custom_call.1']
    %9 = vsyncpa [#allocation3], 0
    // Predicated region
    $region2: #{tpu_custom_call.1} parent=1 // pred_check
      _
    $region3: #{tpu_custom_call.1} parent=1 // pred_check_branch
      %11 = sbr.rel (0) target = $region5
    $region4: #{tpu_custom_call.1} parent=1 // pred_region
      _
    $region5: #{tpu_custom_call.1} parent=1 // pred_fallthru
      _
    // Predicated region
    $region6: #{tpu_custom_call.1} parent=1 // pred_check
      _
    $region7: #{tpu_custom_call.1} parent=1 // pred_check_branch
      %13 = sbr.rel (0) target = $region9
    $region8: #{tpu_custom_call.1} parent=1 // pred_region
      _
    $region9: #{tpu_custom_call.1} parent=1 // pred_fallthru
      _
    // Predicated region
    $region10: #{tpu_custom_call.1} parent=1 // pred_check
      _
    $region11: #{tpu_custom_call.1} parent=1 // pred_check_branch
      %15 = sbr.rel (0) target = $region13
    $region12: #{tpu_custom_call.1} parent=1 // pred_region
      _
    $region13: #{tpu_custom_call.1} parent=1 // pred_fallthru
      _
    // Predicated region
    $region14: #{tpu_custom_call.1} parent=1 // pred_check
      _
    $region15: #{tpu_custom_call.1} parent=1 // pred_check_branch
      %17 = sbr.rel (0) target = $region17
    $region16: #{tpu_custom_call.1} parent=1 // pred_region
      _
    $region17: #{tpu_custom_call.1} parent=1 // pred_fallthru
      _
    %v19 = vld [vmem:[%s0] sm:$0xff]
    %v20 = vld [vmem:[%s0 + $0x8] sm:$0xff]
    %v21 = vld [vmem:[%s0 + $0x10] sm:$0xff]
    %v22 = vld [vmem:[%s0 + $0x18] sm:$0xff]
    %v23 = vand.u32 2147483647, %v19
    %v24 = vand.u32 2147483647, %v20
    %v25 = vand.u32 2147483647, %v21
    %v26 = vand.u32 2147483647, %v22
    %v27 = vsub.f32 0.0, %v23
    %v28 = vsub.f32 0.0, %v24
    %v29 = vsub.f32 0.0, %v25
    %v30 = vsub.f32 0.0, %v26
    %v31 = vmul.f32 %v27, 1.442695
    %v32 = vpow.pop %v31
    %v33 = vmul.f32 %v28, 1.442695
    %v34 = vpow.pop %v33
    %v35 = vmul.f32 %v29, 1.442695
    %v36 = vpow.pop %v35
    %v37 = vmul.f32 %v30, 1.442695
    %v38 = vpow.pop %v37
    %v39 = vadd.f32 %v32, 1.0
    %v40 = vadd.f32 %v34, 1.0
    %v41 = vadd.f32 %v36, 1.0
    %v42 = vadd.f32 %v38, 1.0
    %v43 = vlog2.pop %v39
    %v44 = vmul.f32 %v43, 0.6931472
    %v45 = vlog2.pop %v40
    %v46 = vmul.f32 %v45, 0.6931472
    %v47 = vlog2.pop %v41
    %v48 = vmul.f32 %v47, 0.6931472
    %v49 = vlog2.pop %v42
    %v50 = vmul.f32 %v49, 0.6931472
    %v51 = vmax.f32 %v19, 0.0
    %v52 = vmax.f32 %v20, 0.0
    %v53 = vmax.f32 %v21, 0.0
    %v54 = vmax.f32 %v22, 0.0
    %v55 = vadd.f32 %v51, %v44
    %v56 = vadd.f32 %v52, %v46
    %v57 = vadd.f32 %v53, %v48
    %v58 = vadd.f32 %v54, %v50
    %v59 = vsub.f32 0.0, %v19
    %v60 = vsub.f32 0.0, %v20
    %v61 = vsub.f32 0.0, %v21
    %v62 = vsub.f32 0.0, %v22
    %v63 = vmax.f32 %v59, 0.0
    %v64 = vmax.f32 %v60, 0.0
    %v65 = vmax.f32 %v61, 0.0
    %v66 = vmax.f32 %v62, 0.0
    %v67 = vadd.f32 %v63, %v44
    %v68 = vadd.f32 %v64, %v46
    %v69 = vadd.f32 %v65, %v48
    %v70 = vadd.f32 %v66, %v50
    %v71 = vrcp.pop %v39
    %v72 = vmul.f32 1.0, %v71
    %v73 = vrcp.pop %v40
    %v74 = vmul.f32 1.0, %v73
    %v75 = vrcp.pop %v41
    %v76 = vmul.f32 1.0, %v75
    %v77 = vrcp.pop %v42
    %v78 = vmul.f32 1.0, %v77
    %vm79 = vcmp.ge.f32.partialorder %v19, 0.0
    %vm80 = vcmp.ge.f32.partialorder %v20, 0.0
    %vm81 = vcmp.ge.f32.partialorder %v21, 0.0
    %vm82 = vcmp.ge.f32.partialorder %v22, 0.0
    %v83 = vsel %vm79, 1.0, %v32
    %v84 = vsel %vm80, 1.0, %v34
    %v85 = vsel %vm81, 1.0, %v36
    %v86 = vsel %vm82, 1.0, %v38
    %v87 = vmul.f32 %v83, %v72
    %v88 = vmul.f32 %v84, %v74
    %v89 = vmul.f32 %v85, %v76
    %v90 = vmul.f32 %v86, %v78
    %v91 = vsel %vm79, %v32, 1.0
    %v92 = vsel %vm80, %v34, 1.0
    %v93 = vsel %vm81, %v36, 1.0
    %v94 = vsel %vm82, %v38, 1.0
    %v95 = vmul.f32 %v91, %v72
    %v96 = vmul.f32 %v92, %v74
    %v97 = vmul.f32 %v93, %v76
    %v98 = vmul.f32 %v94, %v78
    %v99 = vmul.f32 %v87, %v87
    %v100 = vmul.f32 %v88, %v88
    %v101 = vmul.f32 %v89, %v89
    %v102 = vmul.f32 %v90, %v90
    %v103 = vmul.f32 %v99, 0.75
    %v104 = vmul.f32 %v100, 0.75
    %v105 = vmul.f32 %v101, 0.75
    %v106 = vmul.f32 %v102, 0.75
    %v107 = vmul.f32 %v103, %v55
    %v108 = vmul.f32 %v104, %v56
    %v109 = vmul.f32 %v105, %v57
    %v110 = vmul.f32 %v106, %v58
    %v111 = vmul.f32 %v95, %v95
    %v112 = vmul.f32 %v96, %v96
    %v113 = vmul.f32 %v97, %v97
    %v114 = vmul.f32 %v98, %v98
    %v115 = vmul.f32 %v111, 0.25
    %v116 = vmul.f32 %v112, 0.25
    %v117 = vmul.f32 %v113, 0.25
    %v118 = vmul.f32 %v114, 0.25
    %v119 = vmul.f32 %v115, %v67
    %v120 = vmul.f32 %v116, %v68
    %v121 = vmul.f32 %v117, %v69
    %v122 = vmul.f32 %v118, %v70
    %v123 = vsub.f32 %v119, %v107
    %v124 = vsub.f32 %v120, %v108
    %v125 = vsub.f32 %v121, %v109
    %v126 = vsub.f32 %v122, %v110
    %v127 = vpack.c.bf16 %v124, %v123
    %v128 = vpack.c.bf16 %v126, %v125
    %v129 = vld [vmem:[%s2] sm:$0xf]
    %v130 = vld [vmem:[%s2 + $0x4] sm:$0x1]
    %v133 = vunpack.c.l.b16 %v129
    %v134 = vunpack.c.l.b16 %v130
    %v135 = vpack.c.b16 %v134, %v133
    %vm136 = vcmask 72704
    %v138 = vsel %vm136, %v127, 0
    %v141 = vsel %vm136, %v128, 0
    %vm143 = vcmask 1043456
    %vm144 = vcmask 1044480
    %v145 = vsel %vm143, 4294967295, 65535
    %v146 = vsel %vm144, %v145, 0
    %v148 = vand.u32 %v135, %v146
    %150 = vmatprep.subr.bf16.mxu0 0
    %151 = vmatpush1.bf16.msra.mxu0 %v148
    %152 = vmatprep.subr.bf16.mxu0 0
    %153 = vmatpush1.bf16.msra.mxu0 0
    %154 = vmatprep.subr.bf16.mxu0 0
    %155 = vmatpush1.bf16.msra.mxu0 0
    %156 = vmatprep.subr.bf16.mxu0 0
    %157 = vmatpush1.bf16.msra.mxu0 0
    %158 = vmatprep.subr.bf16.mxu0 0
    %159 = vmatpush1.bf16.msra.mxu0 0
    %160 = vmatprep.subr.bf16.mxu0 0
    %161 = vmatpush1.bf16.msra.mxu0 0
    %162 = vmatprep.subr.bf16.mxu0 0
    %163 = vmatpush1.bf16.msra.mxu0 0
    %164 = vmatprep.subr.bf16.mxu0 0
    %165 = vmatpush1.bf16.msra.mxu0 0
    %166 = vmatprep.subr.bf16.mxu0 0
    %167 = vmatpush1.bf16.msra.mxu0 0
    %168 = vmatprep.subr.bf16.mxu0 0
    %169 = vmatpush1.bf16.msra.mxu0 0
    %170 = vmatprep.subr.bf16.mxu0 0
    %171 = vmatpush1.bf16.msra.mxu0 0
    %172 = vmatprep.subr.bf16.mxu0 0
    %173 = vmatpush1.bf16.msra.mxu0 0
    %174 = vmatprep.subr.bf16.mxu0 0
    %175 = vmatpush1.bf16.msra.mxu0 0
    %176 = vmatprep.subr.bf16.mxu0 0
    %177 = vmatpush1.bf16.msra.mxu0 0
    %178 = vmatprep.subr.bf16.mxu0 0
    %179 = vmatpush1.bf16.msra.mxu0 0
    %180 = vmatprep.subr.bf16.mxu0 0
    %181 = vmatpush1.bf16.msra.mxu0 0
    %182 = vmatprep.mubr.bf16.mxu0 0
    %183 = vmatmul.mubr.bf16.gmra.mrb[0].mxu0 %v138
    %v184 = vpop.f32.mrb[0].mxu0
    %v185 = vadd.f32 0.0, %v184
    %v186 = vpop.f32.mrb[0].mxu0
    %v187 = vpop.f32.mrb[0].mxu0
    %v188 = vadd.f32 0.0, %v187
    %v189 = vpop.f32.mrb[0].mxu0
    %190 = vmatprep.mubr.bf16.mxu0 0
    %191 = vmatmul.mubr.bf16.gmra.mrb[0].mxu0 %v141
    %v192 = vpop.f32.mrb[0].mxu0
    %v193 = vadd.f32 0.0, %v192
    %v194 = vpop.f32.mrb[0].mxu0
    %v195 = vpop.f32.mrb[0].mxu0
    %v196 = vadd.f32 0.0, %v195
    %v197 = vpop.f32.mrb[0].mxu0
    %198 = vdwg.mxu0
    %v199 = vld [vmem:[%s1] sm:$0xff]
    %v200 = vld [vmem:[%s1 + $0x8] sm:$0xff]
    %v201 = vld [vmem:[%s1 + $0x10] sm:$0xff]
    %v202 = vld [vmem:[%s1 + $0x18] sm:$0xff]
    %v203 = vld [vmem:[%s3] sm:$0xf]
    %205 = vset.pattern.permute.xlu0 0
    %206 = vperm.xlu0 %205, %v199
    %v207 = vpop.permute.xlu0 %206
    %210 = vset.pattern.permute.xlu0 0
    %211 = vperm.xlu0 %210, %v200
    %v212 = vpop.permute.xlu0 %211
    %215 = vset.pattern.permute.xlu0 0
    %216 = vperm.xlu0 %215, %v201
    %v217 = vpop.permute.xlu0 %216
    %220 = vset.pattern.permute.xlu0 0
    %221 = vperm.xlu0 %220, %v202
    %v222 = vpop.permute.xlu0 %221
    %v224 = vlaneseq
    %v225 = vshrl.u32 %v224, 7
    %v226 = vsub.s32 0, %v225
    %v227 = vrot.slane %v203, %v226
    %v228 = vsub.f32 %v207, %v227
    %v229 = vsub.f32 %v212, %v227
    %v230 = vsub.f32 %v217, %v227
    %v231 = vsub.f32 %v222, %v227
    %v232 = vand.u32 2147483647, %v228
    %v233 = vand.u32 2147483647, %v229
    %v234 = vand.u32 2147483647, %v230
    %v235 = vand.u32 2147483647, %v231
    %236 = vset.pattern.permute.xlu0 1
    %237 = vperm.xlu0 %236, %v199
    %v238 = vpop.permute.xlu0 %237
    %240 = vset.pattern.permute.xlu0 1
    %241 = vperm.xlu0 %240, %v200
    %v242 = vpop.permute.xlu0 %241
    %244 = vset.pattern.permute.xlu0 1
    %245 = vperm.xlu0 %244, %v201
    %v246 = vpop.permute.xlu0 %245
    %248 = vset.pattern.permute.xlu0 1
    %249 = vperm.xlu0 %248, %v202
    %v250 = vpop.permute.xlu0 %249
    %v252 = vlaneseq
    %v253 = vshrl.u32 %v252, 7
    %v254 = vsub.s32 1, %v253
    %v255 = vrot.slane %v203, %v254
    %v256 = vsub.f32 %v238, %v255
    %v257 = vsub.f32 %v242, %v255
    %v258 = vsub.f32 %v246, %v255
    %v259 = vsub.f32 %v250, %v255
    %v260 = vand.u32 2147483647, %v256
    %v261 = vand.u32 2147483647, %v257
    %v262 = vand.u32 2147483647, %v258
    %v263 = vand.u32 2147483647, %v259
    %v264 = vadd.f32 %v232, %v260
    %v265 = vadd.f32 %v233, %v261
    %v266 = vadd.f32 %v234, %v262
    %v267 = vadd.f32 %v235, %v263
    %268 = vset.pattern.permute.xlu0 2
    %269 = vperm.xlu0 %268, %v199
    %v270 = vpop.permute.xlu0 %269
    %272 = vset.pattern.permute.xlu0 2
    %273 = vperm.xlu0 %272, %v200
    %v274 = vpop.permute.xlu0 %273
    %276 = vset.pattern.permute.xlu0 2
    %277 = vperm.xlu0 %276, %v201
    %v278 = vpop.permute.xlu0 %277
    %280 = vset.pattern.permute.xlu0 2
    %281 = vperm.xlu0 %280, %v202
    %v282 = vpop.permute.xlu0 %281
    %v284 = vlaneseq
    %v285 = vshrl.u32 %v284, 7
    %v286 = vsub.s32 2, %v285
    %v287 = vrot.slane %v203, %v286
    %v288 = vsub.f32 %v270, %v287
    %v289 = vsub.f32 %v274, %v287
    %v290 = vsub.f32 %v278, %v287
    %v291 = vsub.f32 %v282, %v287
    %v292 = vand.u32 2147483647, %v288
    %v293 = vand.u32 2147483647, %v289
    %v294 = vand.u32 2147483647, %v290
    %v295 = vand.u32 2147483647, %v291
    %v296 = vadd.f32 %v264, %v292
    %v297 = vadd.f32 %v265, %v293
    %v298 = vadd.f32 %v266, %v294
    %v299 = vadd.f32 %v267, %v295
    %300 = vset.pattern.permute.xlu0 3
    %301 = vperm.xlu0 %300, %v199
    %v302 = vpop.permute.xlu0 %301
    %304 = vset.pattern.permute.xlu0 3
    %305 = vperm.xlu0 %304, %v200
    %v306 = vpop.permute.xlu0 %305
    %308 = vset.pattern.permute.xlu0 3
    %309 = vperm.xlu0 %308, %v201
    %v310 = vpop.permute.xlu0 %309
    %312 = vset.pattern.permute.xlu0 3
    %313 = vperm.xlu0 %312, %v202
    %v314 = vpop.permute.xlu0 %313
    %v316 = vlaneseq
    %v317 = vshrl.u32 %v316, 7
    %v318 = vsub.s32 3, %v317
    %v319 = vrot.slane %v203, %v318
    %v320 = vsub.f32 %v302, %v319
    %v321 = vsub.f32 %v306, %v319
    %v322 = vsub.f32 %v310, %v319
    %v323 = vsub.f32 %v314, %v319
    %v324 = vand.u32 2147483647, %v320
    %v325 = vand.u32 2147483647, %v321
    %v326 = vand.u32 2147483647, %v322
    %v327 = vand.u32 2147483647, %v323
    %v328 = vadd.f32 %v296, %v324
    %v329 = vadd.f32 %v297, %v325
    %v330 = vadd.f32 %v298, %v326
    %v331 = vadd.f32 %v299, %v327
    %v332 = vmul.f32 %v199, 0.5
    %v333 = vmul.f32 %v200, 0.5
    %v334 = vmul.f32 %v201, 0.5
    %v335 = vmul.f32 %v202, 0.5
    %340 = vrot.lane.b32.xlu0 %v332, 126
    %v341 = vpop.permute.xlu0 %340
    %342 = vrot.lane.b32.xlu0 %v333, 126
    %v343 = vpop.permute.xlu0 %342
    %344 = vrot.lane.b32.xlu0 %v334, 126
    %v345 = vpop.permute.xlu0 %344
    %346 = vrot.lane.b32.xlu0 %v335, 126
    %v347 = vpop.permute.xlu0 %346
    %v352 = vsub.f32 %v199, %v341
    %v353 = vsub.f32 %v200, %v343
    %v354 = vsub.f32 %v201, %v345
    %v355 = vsub.f32 %v202, %v347
    %v356 = vadd.f32 %v199, %v341
    %v357 = vadd.f32 %v200, %v343
    %v358 = vadd.f32 %v201, %v345
    %v359 = vadd.f32 %v202, %v347
    %v360 = vmul.f32 %v203, 0.5
    %v362 = vrot.slane %v360, 2
    %v364 = vsub.f32 %v203, %v362
    %v365 = vadd.f32 %v203, %v362
    %v366 = vsub.f32 %v356, %v352
    %v367 = vsub.f32 %v357, %v353
    %v368 = vsub.f32 %v358, %v354
    %v369 = vsub.f32 %v359, %v355
    %374 = vrot.lane.b32.xlu0 %v366, 127
    %v375 = vpop.permute.xlu0 %374
    %376 = vrot.lane.b32.xlu0 %v367, 127
    %v377 = vpop.permute.xlu0 %376
    %378 = vrot.lane.b32.xlu0 %v368, 127
    %v379 = vpop.permute.xlu0 %378
    %380 = vrot.lane.b32.xlu0 %v369, 127
    %v381 = vpop.permute.xlu0 %380
    %v386 = vmul.f32 %v366, %v375
    %v387 = vmul.f32 %v367, %v377
    %v388 = vmul.f32 %v368, %v379
    %v389 = vmul.f32 %v369, %v381
    %v390 = vsub.f32 %v365, %v364
    %v392 = vrot.slane %v390, 1
    %v394 = vmul.f32 %v390, %v392
    %396 = vset.pattern.permute.xlu0 0
    %397 = vperm.xlu0 %396, %v356
    %v398 = vpop.permute.xlu0 %397
    %401 = vset.pattern.permute.xlu0 0
    %402 = vperm.xlu0 %401, %v357
    %v403 = vpop.permute.xlu0 %402
    %406 = vset.pattern.permute.xlu0 0
    %407 = vperm.xlu0 %406, %v358
    %v408 = vpop.permute.xlu0 %407
    %411 = vset.pattern.permute.xlu0 0
    %412 = vperm.xlu0 %411, %v359
    %v413 = vpop.permute.xlu0 %412
    %v415 = vlaneseq
    %v416 = vshrl.u32 %v415, 7
    %v417 = vsub.s32 0, %v416
    %v418 = vrot.slane %v365, %v417
    %v419 = vmin.f32 %v398, %v418
    %v420 = vmin.f32 %v403, %v418
    %v421 = vmin.f32 %v408, %v418
    %v422 = vmin.f32 %v413, %v418
    %424 = vset.pattern.permute.xlu0 0
    %425 = vperm.xlu0 %424, %v352
    %v426 = vpop.permute.xlu0 %425
    %429 = vset.pattern.permute.xlu0 0
    %430 = vperm.xlu0 %429, %v353
    %v431 = vpop.permute.xlu0 %430
    %434 = vset.pattern.permute.xlu0 0
    %435 = vperm.xlu0 %434, %v354
    %v436 = vpop.permute.xlu0 %435
    %439 = vset.pattern.permute.xlu0 0
    %440 = vperm.xlu0 %439, %v355
    %v441 = vpop.permute.xlu0 %440
    %v443 = vlaneseq
    %v444 = vshrl.u32 %v443, 7
    %v445 = vsub.s32 0, %v444
    %v446 = vrot.slane %v364, %v445
    %v447 = vmax.f32 %v426, %v446
    %v448 = vmax.f32 %v431, %v446
    %v449 = vmax.f32 %v436, %v446
    %v450 = vmax.f32 %v441, %v446
    %v451 = vsub.f32 %v419, %v447
    %v452 = vsub.f32 %v420, %v448
    %v453 = vsub.f32 %v421, %v449
    %v454 = vsub.f32 %v422, %v450
    %v455 = vmax.f32 %v451, 0.0
    %v456 = vmax.f32 %v452, 0.0
    %v457 = vmax.f32 %v453, 0.0
    %v458 = vmax.f32 %v454, 0.0
    %459 = vset.pattern.permute.xlu0 1
    %460 = vperm.xlu0 %459, %v356
    %v461 = vpop.permute.xlu0 %460
    %463 = vset.pattern.permute.xlu0 1
    %464 = vperm.xlu0 %463, %v357
    %v465 = vpop.permute.xlu0 %464
    %467 = vset.pattern.permute.xlu0 1
    %468 = vperm.xlu0 %467, %v358
    %v469 = vpop.permute.xlu0 %468
    %471 = vset.pattern.permute.xlu0 1
    %472 = vperm.xlu0 %471, %v359
    %v473 = vpop.permute.xlu0 %472
    %v475 = vlaneseq
    %v476 = vshrl.u32 %v475, 7
    %v477 = vsub.s32 1, %v476
    %v478 = vrot.slane %v365, %v477
    %v479 = vmin.f32 %v461, %v478
    %v480 = vmin.f32 %v465, %v478
    %v481 = vmin.f32 %v469, %v478
    %v482 = vmin.f32 %v473, %v478
    %483 = vset.pattern.permute.xlu0 1
    %484 = vperm.xlu0 %483, %v352
    %v485 = vpop.permute.xlu0 %484
    %487 = vset.pattern.permute.xlu0 1
    %488 = vperm.xlu0 %487, %v353
    %v489 = vpop.permute.xlu0 %488
    %491 = vset.pattern.permute.xlu0 1
    %492 = vperm.xlu0 %491, %v354
    %v493 = vpop.permute.xlu0 %492
    %495 = vset.pattern.permute.xlu0 1
    %496 = vperm.xlu0 %495, %v355
    %v497 = vpop.permute.xlu0 %496
    %v499 = vlaneseq
    %v500 = vshrl.u32 %v499, 7
    %v501 = vsub.s32 1, %v500
    %v502 = vrot.slane %v364, %v501
    %v503 = vmax.f32 %v485, %v502
    %v504 = vmax.f32 %v489, %v502
    %v505 = vmax.f32 %v493, %v502
    %v506 = vmax.f32 %v497, %v502
    %v507 = vsub.f32 %v479, %v503
    %v508 = vsub.f32 %v480, %v504
    %v509 = vsub.f32 %v481, %v505
    %v510 = vsub.f32 %v482, %v506
    %v511 = vmax.f32 %v507, 0.0
    %v512 = vmax.f32 %v508, 0.0
    %v513 = vmax.f32 %v509, 0.0
    %v514 = vmax.f32 %v510, 0.0
    %v515 = vmul.f32 %v455, %v511
    %v516 = vmul.f32 %v456, %v512
    %v517 = vmul.f32 %v457, %v513
    %v518 = vmul.f32 %v458, %v514
    %520 = vset.pattern.permute.xlu0 0
    %521 = vperm.xlu0 %520, %v386
    %v522 = vpop.permute.xlu0 %521
    %525 = vset.pattern.permute.xlu0 0
    %526 = vperm.xlu0 %525, %v387
    %v527 = vpop.permute.xlu0 %526
    %530 = vset.pattern.permute.xlu0 0
    %531 = vperm.xlu0 %530, %v388
    %v532 = vpop.permute.xlu0 %531
    %535 = vset.pattern.permute.xlu0 0
    %536 = vperm.xlu0 %535, %v389
    %v537 = vpop.permute.xlu0 %536
    %v539 = vlaneseq
    %v540 = vshrl.u32 %v539, 7
    %v541 = vsub.s32 0, %v540
    %v542 = vrot.slane %v394, %v541
    %v543 = vadd.f32 %v522, %v542
    %v544 = vadd.f32 %v527, %v542
    %v545 = vadd.f32 %v532, %v542
    %v546 = vadd.f32 %v537, %v542
    %v547 = vsub.f32 %v543, %v515
    %v548 = vsub.f32 %v544, %v516
    %v549 = vsub.f32 %v545, %v517
    %v550 = vsub.f32 %v546, %v518
    %v551 = vmax.f32 %v547, 1e-12
    %v552 = vmax.f32 %v548, 1e-12
    %v553 = vmax.f32 %v549, 1e-12
    %v554 = vmax.f32 %v550, 1e-12
    %v555 = vrcp.pop %v551
    %v556 = vrcp.pop %v552
    %v557 = vrcp.pop %v553
    %v558 = vrcp.pop %v554
    %v559 = vmul.f32 %v515, %v555
    %v560 = vmul.f32 %v516, %v556
    %v561 = vmul.f32 %v517, %v557
    %v562 = vmul.f32 %v518, %v558
    %v563 = vmax.f32 %v398, %v418
    %v564 = vmax.f32 %v403, %v418
    %v565 = vmax.f32 %v408, %v418
    %v566 = vmax.f32 %v413, %v418
    %v567 = vmin.f32 %v426, %v446
    %v568 = vmin.f32 %v431, %v446
    %v569 = vmin.f32 %v436, %v446
    %v570 = vmin.f32 %v441, %v446
    %v571 = vsub.f32 %v563, %v567
    %v572 = vsub.f32 %v564, %v568
    %v573 = vsub.f32 %v565, %v569
    %v574 = vsub.f32 %v566, %v570
    %v575 = vmax.f32 %v571, 0.0
    %v576 = vmax.f32 %v572, 0.0
    %v577 = vmax.f32 %v573, 0.0
    %v578 = vmax.f32 %v574, 0.0
    %v579 = vmax.f32 %v461, %v478
    %v580 = vmax.f32 %v465, %v478
    %v581 = vmax.f32 %v469, %v478
    %v582 = vmax.f32 %v473, %v478
    %v583 = vmin.f32 %v485, %v502
    %v584 = vmin.f32 %v489, %v502
    %v585 = vmin.f32 %v493, %v502
    %v586 = vmin.f32 %v497, %v502
    %v587 = vsub.f32 %v579, %v583
    %v588 = vsub.f32 %v580, %v584
    %v589 = vsub.f32 %v581, %v585
    %v590 = vsub.f32 %v582, %v586
    %v591 = vmax.f32 %v587, 0.0
    %v592 = vmax.f32 %v588, 0.0
    %v593 = vmax.f32 %v589, 0.0
    %v594 = vmax.f32 %v590, 0.0
    %v595 = vmul.f32 %v575, %v591
    %v596 = vmul.f32 %v576, %v592
    %v597 = vmul.f32 %v577, %v593
    %v598 = vmul.f32 %v578, %v594
    %v599 = vsub.f32 %v595, %v547
    %v600 = vsub.f32 %v596, %v548
    %v601 = vsub.f32 %v597, %v549
    %v602 = vsub.f32 %v598, %v550
    %v603 = vmax.f32 %v595, 1e-12
    %v604 = vmax.f32 %v596, 1e-12
    %v605 = vmax.f32 %v597, 1e-12
    %v606 = vmax.f32 %v598, 1e-12
    %v607 = vrcp.pop %v603
    %v608 = vrcp.pop %v604
    %v609 = vrcp.pop %v605
    %v610 = vrcp.pop %v606
    %v611 = vmul.f32 %v599, %v607
    %v612 = vmul.f32 %v600, %v608
    %v613 = vmul.f32 %v601, %v609
    %v614 = vmul.f32 %v602, %v610
    %v615 = vsub.f32 %v559, %v611
    %v616 = vsub.f32 %v560, %v612
    %v617 = vsub.f32 %v561, %v613
    %v618 = vsub.f32 %v562, %v614
    %v619 = vmul.f32 %v328, 5.0
    %v620 = vmul.f32 %v329, 5.0
    %v621 = vmul.f32 %v330, 5.0
    %v622 = vmul.f32 %v331, 5.0
    %v623 = vmul.f32 %v185, 2.0
    %v624 = vmul.f32 %v188, 2.0
    %v625 = vmul.f32 %v193, 2.0
    %v626 = vmul.f32 %v196, 2.0
    %v627 = vadd.f32 %v619, %v623
    %v628 = vadd.f32 %v620, %v624
    %v629 = vadd.f32 %v621, %v625
    %v630 = vadd.f32 %v622, %v626
    %v631 = vsub.f32 0.0, %v615
    %v632 = vsub.f32 0.0, %v616
    %v633 = vsub.f32 0.0, %v617
    %v634 = vsub.f32 0.0, %v618
    %v635 = vmul.f32 %v631, 2.0
    %v636 = vmul.f32 %v632, 2.0
    %v637 = vmul.f32 %v633, 2.0
    %v638 = vmul.f32 %v634, 2.0
    %v639 = vadd.f32 %v627, %v635
    %v640 = vadd.f32 %v628, %v636
    %v641 = vadd.f32 %v629, %v637
    %v642 = vadd.f32 %v630, %v638
    %643 = vst [vmem:[#allocation2] sm:$0xff] %v639
    %644 = vst [vmem:[#allocation2 + $0x8] sm:$0xff] %v640
    %645 = vst [vmem:[#allocation2 + $0x10] sm:$0xff] %v641
    %646 = vst [vmem:[#allocation2 + $0x18] sm:$0xff] %v642
    // Predicated region
    $region18: #{tpu_custom_call.1} parent=1 // pred_check
      _
    $region19: #{tpu_custom_call.1} parent=1 // pred_check_branch
      %648 = sbr.rel (0) target = $region21
    $region20: #{tpu_custom_call.1} parent=1 // pred_region
      %s650 = ssub.s32 512, 512
      %651 = vsyncadd [#allocation3], %s650
      %s652 = sshll.u32 [#allocation2], 4
      %s653 = int_to_ptr.vmem [resolvable:$true] %s652
      %658 = dma.vmem_to_hbm [thread:$0]  %s653, 512, %s4, [#allocation3], 128, 128, 8
    $region21: #{tpu_custom_call.1} parent=1 // pred_fallthru
      _
    // Predicated region
    $region22: #{tpu_custom_call.1} parent=1 // pred_check
      _
    $region23: #{tpu_custom_call.1} parent=1 // pred_check_branch
      %660 = sbr.rel (0) target = $region25
    $region24: #{tpu_custom_call.1} parent=1 // pred_region
      %661 = dma.done [#allocation3], 512
    $region25: #{tpu_custom_call.1} parent=1 // pred_fallthru
      _
    %662 = vsyncpa [#allocation3], 1

</llo_original>
